<compile_context>
chip_gen: v7x
topology: tpu7x:2x2x1
jax: 0.10.0
libtpu: 0.0.40
codegen_flags: <defaults>
</compile_context>

<pallas_src>
import functools

import jax
import jax.numpy as jnp
from jax.experimental import pallas as pl
from jax.experimental.pallas import tpu as pltpu


# ----------------------------------------------------------------------------
# Fused forward kernel: everything VMEM-resident, no grid.
# ----------------------------------------------------------------------------
def _kifnet_kernel(xkin_ref, patches_ref, wpack_ref, bpack_ref, out_ref, *,
                   wmeta, bmeta, dims):
    """Whole KIFNet forward on VMEM-resident operands.

    xkin_ref    : (B, inp_dim)      f32
    patches_ref : (9*C + 1, B*H*W)  bf16  im2col, ones row folds the conv bias
    wpack_ref   : (Rw, 128)         bf16  all weights, 16-row-aligned blocks
    bpack_ref   : (Rb, 128)         f32   all biases, 8-row-aligned rows
    out_ref     : (B, out_dim)      f32
    """
    B = xkin_ref.shape[0]
    HW = dims["HW"]
    emb = dims["emb"]
    n_kin, n_sig, n_dec = dims["n_kin"], dims["n_sig"], dims["n_dec"]

    def w(name):                       # static, tile-aligned view -> zero cost
        off, r, c = wmeta[name]
        return wpack_ref[off:off + r, :c]

    def b(name):
        off, c = bmeta[name]
        return bpack_ref[off:off + 1, :c]

    def mm(act, weight):
        # bf16 operands on the MXU, f32 accumulation; elementwise stays f32.
        return jnp.dot(act.astype(jnp.bfloat16), weight,
                       preferred_element_type=jnp.float32)

    # ---- kinematic branch: Single_Single MLP (batch-major, tiny) ----
    kin = xkin_ref[...]
    for i in range(n_kin):
        kin = mm(kin, w(f"kin_w{i}")) + b(f"kin_b{i}")
        if i < n_kin - 1:
            kin = jnp.maximum(kin, 0.0)

    # ---- vision branch: one lane-dense conv matmul, transposed layout ----
    # feat[c_out, b*HW + h*W + w]; conv bias rides the ones row of patches.
    feat = jnp.dot(w("conv_w"), patches_ref[...],
                   preferred_element_type=jnp.float32)            # (Ch, B*HW)
    feat = jnp.maximum(feat, 0.0)

    # Global-average-pool: per-batch lane-slice reductions (128-aligned slices),
    # then transpose only the tiny (Ch, B) result back to batch-major.
    cols = [jnp.mean(feat[:, bi * HW:(bi + 1) * HW], axis=1, keepdims=True)
            for bi in range(B)]
    pooled_t = jnp.concatenate(cols, axis=1)                      # (Ch, B)
    pooled = jnp.transpose(pooled_t)                               # (B, Ch)

    cv = mm(pooled, w("proj_w")) + b("proj_b")                     # (B, emb)

    # ---- fusion 'mlp-att': split-weight sigmoid_net (no concat) + blend ----
    off0, r0, c0 = wmeta["sig_w0"]
    w_cv = wpack_ref[off0:off0 + emb, :c0]         # rows for the cv half
    w_kin = wpack_ref[off0 + emb:off0 + r0, :c0]   # rows for the kin half
    alpha = mm(cv, w_cv) + mm(kin, w_kin) + b("sig_b0")
    if n_sig > 1:
        alpha = jnp.maximum(alpha, 0.0)
    for i in range(1, n_sig):
        alpha = mm(alpha, w(f"sig_w{i}")) + b(f"sig_b{i}")
        if i < n_sig - 1:
            alpha = jnp.maximum(alpha, 0.0)
    # TODO(synk): reference FusionNet uses the raw sigmoid_net output as alpha
    # (no explicit sigmoid in FusionNet.forward); we follow that literally.
    fusion_out = cv * alpha + kin * (1.0 - alpha)                  # (B, emb)

    # ---- merged decoders: stacked first layer + block-diagonal later layers ----
    dec = fusion_out
    for i in range(n_dec):
        dec = mm(dec, w(f"dec_w{i}")) + b(f"dec_b{i}")
        if i < n_dec - 1:
            dec = jnp.maximum(dec, 0.0)

    out_ref[...] = dec.astype(out_ref.dtype)                       # (B, out_dim)


# ----------------------------------------------------------------------------
# Parameter initialization (deterministic, PyTorch-style uniform(+-1/sqrt(fan_in)))
# ----------------------------------------------------------------------------
def init_linear(key, fan_in, fan_out):
    k1, k2 = jax.random.split(key)
    bound = 1.0 / (fan_in ** 0.5)
    w = jax.random.uniform(k1, (fan_in, fan_out), jnp.float32, -bound, bound)
    b = jax.random.uniform(k2, (1, fan_out), jnp.float32, -bound, bound)
    return w, b


def init_mlp(key, dims):
    """dims = [inp, hidden..., out] -> list of (w, b)."""
    keys = jax.random.split(key, len(dims) - 1)
    return [init_linear(k, fi, fo) for k, fi, fo in zip(keys, dims[:-1], dims[1:])]


def init_kifnet(key, *, inp_dim, out_dim, kinematic_emb, image_emb,
                hidden_dims, fusion_dims, img_channels, conv_hidden):
    assert kinematic_emb == image_emb, "mlp-att fusion requires matching embeddings"
    decoder_output = image_emb  # fusion not in ('concat', ...)
    keys = jax.random.split(key, 5 + out_dim)
    params = {}

    # kinematic_model: Single_Single(inp_dim -> hidden_dims -> kinematic_emb)
    params["kin_mlp"] = init_mlp(keys[0], [inp_dim] + list(hidden_dims) + [kinematic_emb])

    # cv_model stand-in: conv3x3 (img_channels -> conv_hidden) + GAP + proj to image_emb
    kc1, kc2 = jax.random.split(keys[1])
    bound = 1.0 / ((img_channels * 9) ** 0.5)
    w_conv = jax.random.uniform(kc1, (conv_hidden, img_channels, 3, 3),
                                jnp.float32, -bound, bound)
    b_conv = jax.random.uniform(kc2, (conv_hidden,), jnp.float32, -bound, bound)
    # (c_out, ky, kx, c_in) -> (c_out, tap*C + c_in), bias folded as last column.
    conv_wT = jnp.transpose(w_conv, (0, 2, 3, 1)).reshape(conv_hidden, 9 * img_channels)
    params["conv_wT_aug"] = jnp.concatenate([conv_wT, b_conv.reshape(conv_hidden, 1)], axis=1)
    params["proj_w"], params["proj_b"] = init_linear(keys[2], conv_hidden, image_emb)

    # fusion_net.sigmoid_net: Single_Single(decoder_output*2 -> fusion_dims -> 1)
    params["sigmoid_net"] = init_mlp(keys[3], [decoder_output * 2] + list(fusion_dims) + [1])

    # decoders: out_dim x Single_Single(decoder_output -> fusion_dims -> 1), merged
    # into stacked (layer 0) / block-diagonal (layers > 0) weights so all heads run
    # as one lane-dense matmul chain inside the fused kernel.
    dec_list = [init_mlp(keys[5 + i], [decoder_output] + list(fusion_dims) + [1])
                for i in range(out_dim)]
    merged = []
    for li in range(len(dec_list[0])):
        ws = [d[li][0] for d in dec_list]
        bs = [d[li][1] for d in dec_list]
        w_m = jnp.concatenate(ws, axis=1) if li == 0 else jax.scipy.linalg.block_diag(*ws)
        b_m = jnp.concatenate(bs, axis=1)
        merged.append((w_m, b_m))
    params["dec_merged"] = merged
    return params


# ----------------------------------------------------------------------------
# Host-side packing: all weights -> one bf16 (R,128) buffer; biases -> f32 buffer.
# ----------------------------------------------------------------------------
def _pack_params(params):
    wblocks, bblocks = [], []
    for i, (wi, bi) in enumerate(params["kin_mlp"]):
        wblocks.append((f"kin_w{i}", wi)); bblocks.append((f"kin_b{i}", bi))
    wblocks.append(("conv_w", params["conv_wT_aug"]))          # bias already folded
    wblocks.append(("proj_w", params["proj_w"])); bblocks.append(("proj_b", params["proj_b"]))
    for i, (wi, bi) in enumerate(params["sigmoid_net"]):
        wblocks.append((f"sig_w{i}", wi)); bblocks.append((f"sig_b{i}", bi))
    for i, (wi, bi) in enumerate(params["dec_merged"]):
        wblocks.append((f"dec_w{i}", wi)); bblocks.append((f"dec_b{i}", bi))

    # Weights: bf16, each block starts on a 16-row (bf16 tile) boundary.
    wmeta, off = {}, 0
    for name, a in wblocks:
        r, c = a.shape
        assert c <= 128, (name, a.shape)
        wmeta[name] = (off, r, c)
        off += ((r + 15) // 16) * 16
    wpack = jnp.zeros((max(off, 16), 128), jnp.bfloat16)
    for name, a in wblocks:
        o, r, c = wmeta[name]
        wpack = wpack.at[o:o + r, :c].set(a.astype(jnp.bfloat16))

    # Biases: f32, one bias per 8-row-aligned row (always tile-aligned reads).
    bmeta = {name: (idx * 8, a.shape[-1]) for idx, (name, a) in enumerate(bblocks)}
    bpack = jnp.zeros((max(8 * len(bblocks), 8), 128), jnp.float32)
    for name, a in bblocks:
        o, c = bmeta[name]
        bpack = bpack.at[o:o + 1, :c].set(a.reshape(1, -1).astype(jnp.float32))
    return wpack, bpack, wmeta, bmeta


# ----------------------------------------------------------------------------
# KIFNet forward (fusion = 'mlp-att'): one fused pallas_call, 4 input DMAs.
# ----------------------------------------------------------------------------
def make_kifnet_forward(params):
    wpack, bpack, wmeta, bmeta = _pack_params(params)   # packed once, outside jit
    n_kin = len(params["kin_mlp"])
    n_sig = len(params["sigmoid_net"])
    n_dec = len(params["dec_merged"])
    emb = params["proj_w"].shape[1]
    out_dim = params["dec_merged"][-1][0].shape[1]
    conv_k = params["conv_wT_aug"].shape[1]              # 9*C + 1

    @jax.jit
    def forward(X_kin, X_cv):
        B, C, H, W = X_cv.shape
        assert conv_k == 9 * C + 1, "channel mismatch with conv weights"

        # Wrapper-side im2col (tiny gather XLA fuses before the call), lane-dense,
        # bf16, with a ones row so the conv bias is folded into the weight matmul.
        x = jnp.transpose(X_cv, (0, 2, 3, 1)).astype(jnp.float32)       # NHWC
        xp = jnp.pad(x, ((0, 0), (1, 1), (1, 1), (0, 0)))
        taps = [xp[:, ky:ky + H, kx:kx + W, :] for ky in range(3) for kx in range(3)]
        pat = jnp.stack(taps, axis=0)                                    # (9,B,H,W,C)
        pat = jnp.transpose(pat, (0, 4, 1, 2, 3)).reshape(9 * C, B * H * W)
        patches = jnp.concatenate(
            [pat, jnp.ones((1, B * H * W), jnp.float32)], axis=0).astype(jnp.bfloat16)

        dims = dict(HW=H * W, emb=emb, n_kin=n_kin, n_sig=n_sig, n_dec=n_dec)
        kernel = functools.partial(_kifnet_kernel, wmeta=wmeta, bmeta=bmeta, dims=dims)
        vmem = pl.BlockSpec(memory_space=pltpu.MemorySpace.VMEM)
        # TODO(synk): for large batches add a batch grid axis with
        # dimension_semantics=("parallel",) so v7x's second TensorCore is used;
        # at B=2 a single no-grid invocation is the right shape.
        return pl.pallas_call(
            kernel,
            out_shape=jax.ShapeDtypeStruct((B, out_dim), jnp.float32),
            in_specs=[vmem, vmem, vmem, vmem],
            out_specs=vmem,
        )(X_kin.astype(jnp.float32), patches, wpack, bpack)

    return forward


# ----------------------------------------------------------------------------
if __name__ == "__main__":
    key = jax.random.PRNGKey(0)
    k_params, k_kin, k_cv = jax.random.split(key, 3)

    B = 2
    inp_dim = 12          # kinematic feature dim
    out_dim = 3           # number of decoders / regression targets
    kinematic_emb = 32
    image_emb = 32
    hidden_dims = [32]
    fusion_dims = [16]
    img_channels, img_size = 3, 16
    conv_hidden = 8

    params = init_kifnet(
        k_params,
        inp_dim=inp_dim, out_dim=out_dim,
        kinematic_emb=kinematic_emb, image_emb=image_emb,
        hidden_dims=hidden_dims, fusion_dims=fusion_dims,
        img_channels=img_channels, conv_hidden=conv_hidden,
    )
    kifnet_forward = make_kifnet_forward(params)

    X_kin = jax.random.normal(k_kin, (B, inp_dim), jnp.float32)
    X_cv = jax.random.normal(k_cv, (B, img_channels, img_size, img_size), jnp.float32)

    out = jax.block_until_ready(kifnet_forward(X_kin, X_cv))
    assert out.shape == (B, out_dim), out.shape
    print("KERNEL_OK")
</pallas_src>

<mosaic_0001>
module attributes {stable_mosaic.version = 11 : i64} {
  func.func @_kifnet_kernel(%arg0: memref<2x12xf32, #tpu.memory_space<vmem>>, %arg1: memref<28x512xbf16, #tpu.memory_space<vmem>>, %arg2: memref<240x128xbf16, #tpu.memory_space<vmem>>, %arg3: memref<56x128xf32, #tpu.memory_space<vmem>>, %arg4: memref<2x3xf32, #tpu.memory_space<vmem>>) attributes {dimension_semantics = [], scalar_prefetch = 0 : i64, scratch_operands = 0 : i64, tpu.core_type = #tpu.core_type<tc>} {
    %c0 = arith.constant 0 : index
    %c0_0 = arith.constant 0 : index
    %0 = vector.load %arg0[%c0, %c0_0] : memref<2x12xf32, #tpu.memory_space<vmem>>, vector<2x12xf32>
    %c0_1 = arith.constant 0 : index
    %c0_2 = arith.constant 0 : index
    %1 = vector.load %arg2[%c0_1, %c0_2] : memref<240x128xbf16, #tpu.memory_space<vmem>>, vector<12x32xbf16>
    %2 = arith.truncf %0 : vector<2x12xf32> to vector<2x12xbf16>
    %cst = arith.constant dense<0.000000e+00> : vector<2x32xf32>
    %3 = tpu.matmul %2, %1, %cst {dimension_numbers = #tpu.dot_dimension_numbers<[1], [0], [0], [1], [0, 0, 1, 1], [], []>} : vector<2x12xbf16>, vector<12x32xbf16>, vector<2x32xf32> -> vector<2x32xf32>
    %c0_3 = arith.constant 0 : index
    %c0_4 = arith.constant 0 : index
    %4 = vector.load %arg3[%c0_3, %c0_4] : memref<56x128xf32, #tpu.memory_space<vmem>>, vector<1x32xf32>
    %5 = vector.broadcast %4 : vector<1x32xf32> to vector<2x32xf32>
    %6 = arith.addf %3, %5 : vector<2x32xf32>
    %cst_5 = arith.constant 0.000000e+00 : f32
    %7 = vector.broadcast %cst_5 : f32 to vector<2x32xf32>
    %8 = arith.maximumf %6, %7 : vector<2x32xf32>
    %c16 = arith.constant 16 : index
    %c0_6 = arith.constant 0 : index
    %9 = vector.load %arg2[%c16, %c0_6] : memref<240x128xbf16, #tpu.memory_space<vmem>>, vector<32x32xbf16>
    %10 = arith.truncf %8 : vector<2x32xf32> to vector<2x32xbf16>
    %cst_7 = arith.constant dense<0.000000e+00> : vector<2x32xf32>
    %11 = tpu.matmul %10, %9, %cst_7 {dimension_numbers = #tpu.dot_dimension_numbers<[1], [0], [0], [1], [0, 0, 1, 1], [], []>} : vector<2x32xbf16>, vector<32x32xbf16>, vector<2x32xf32> -> vector<2x32xf32>
    %c8 = arith.constant 8 : index
    %c0_8 = arith.constant 0 : index
    %12 = vector.load %arg3[%c8, %c0_8] : memref<56x128xf32, #tpu.memory_space<vmem>>, vector<1x32xf32>
    %13 = vector.broadcast %12 : vector<1x32xf32> to vector<2x32xf32>
    %14 = arith.addf %11, %13 : vector<2x32xf32>
    %c48 = arith.constant 48 : index
    %c0_9 = arith.constant 0 : index
    %15 = vector.load %arg2[%c48, %c0_9] : memref<240x128xbf16, #tpu.memory_space<vmem>>, vector<8x28xbf16>
    %c0_10 = arith.constant 0 : index
    %c0_11 = arith.constant 0 : index
    %16 = vector.load %arg1[%c0_10, %c0_11] : memref<28x512xbf16, #tpu.memory_space<vmem>>, vector<28x512xbf16>
    %cst_12 = arith.constant dense<0.000000e+00> : vector<8x512xf32>
    %17 = tpu.matmul %15, %16, %cst_12 {dimension_numbers = #tpu.dot_dimension_numbers<[1], [0], [0], [1], [0, 0, 1, 1], [], []>} : vector<8x28xbf16>, vector<28x512xbf16>, vector<8x512xf32> -> vector<8x512xf32>
    %cst_13 = arith.constant 0.000000e+00 : f32
    %18 = vector.broadcast %cst_13 : f32 to vector<8x512xf32>
    %19 = arith.maximumf %17, %18 : vector<8x512xf32>
    %20 = vector.extract_strided_slice %19 {offsets = [0, 0], sizes = [8, 256], strides = [1, 1]} : vector<8x512xf32> to vector<8x256xf32>
    %cst_14 = arith.constant dense<0.000000e+00> : vector<8xf32>
    %21 = vector.multi_reduction <add>, %20, %cst_14 [1] : vector<8x256xf32> to vector<8xf32>
    %22 = vector.shape_cast %21 : vector<8xf32> to vector<8x1xf32>
    %cst_15 = arith.constant 2.560000e+02 : f32
    %23 = vector.broadcast %cst_15 : f32 to vector<8x1xf32>
    %24 = arith.divf %22, %23 : vector<8x1xf32>
    %25 = vector.extract_strided_slice %19 {offsets = [0, 256], sizes = [8, 256], strides = [1, 1]} : vector<8x512xf32> to vector<8x256xf32>
    %cst_16 = arith.constant dense<0.000000e+00> : vector<8xf32>
    %26 = vector.multi_reduction <add>, %25, %cst_16 [1] : vector<8x256xf32> to vector<8xf32>
    %27 = vector.shape_cast %26 : vector<8xf32> to vector<8x1xf32>
    %cst_17 = arith.constant 2.560000e+02 : f32
    %28 = vector.broadcast %cst_17 : f32 to vector<8x1xf32>
    %29 = arith.divf %27, %28 : vector<8x1xf32>
    %30 = tpu.concatenate %24, %29 in 1 : vector<8x1xf32>, vector<8x1xf32> -> vector<8x2xf32>
    %31 = tpu.transpose %30, [1, 0] : vector<8x2xf32> -> vector<2x8xf32>
    %c64 = arith.constant 64 : index
    %c0_18 = arith.constant 0 : index
    %32 = vector.load %arg2[%c64, %c0_18] : memref<240x128xbf16, #tpu.memory_space<vmem>>, vector<8x32xbf16>
    %33 = arith.truncf %31 : vector<2x8xf32> to vector<2x8xbf16>
    %cst_19 = arith.constant dense<0.000000e+00> : vector<2x32xf32>
    %34 = tpu.matmul %33, %32, %cst_19 {dimension_numbers = #tpu.dot_dimension_numbers<[1], [0], [0], [1], [0, 0, 1, 1], [], []>} : vector<2x8xbf16>, vector<8x32xbf16>, vector<2x32xf32> -> vector<2x32xf32>
    %c16_20 = arith.constant 16 : index
    %c0_21 = arith.constant 0 : index
    %35 = vector.load %arg3[%c16_20, %c0_21] : memref<56x128xf32, #tpu.memory_space<vmem>>, vector<1x32xf32>
    %36 = vector.broadcast %35 : vector<1x32xf32> to vector<2x32xf32>
    %37 = arith.addf %34, %36 : vector<2x32xf32>
    %c80 = arith.constant 80 : index
    %c0_22 = arith.constant 0 : index
    %38 = vector.load %arg2[%c80, %c0_22] : memref<240x128xbf16, #tpu.memory_space<vmem>>, vector<32x16xbf16>
    %c112 = arith.constant 112 : index
    %c0_23 = arith.constant 0 : index
    %39 = vector.load %arg2[%c112, %c0_23] : memref<240x128xbf16, #tpu.memory_space<vmem>>, vector<32x16xbf16>
    %40 = arith.truncf %37 : vector<2x32xf32> to vector<2x32xbf16>
    %cst_24 = arith.constant dense<0.000000e+00> : vector<2x16xf32>
    %41 = tpu.matmul %40, %38, %cst_24 {dimension_numbers = #tpu.dot_dimension_numbers<[1], [0], [0], [1], [0, 0, 1, 1], [], []>} : vector<2x32xbf16>, vector<32x16xbf16>, vector<2x16xf32> -> vector<2x16xf32>
    %42 = arith.truncf %14 : vector<2x32xf32> to vector<2x32xbf16>
    %cst_25 = arith.constant dense<0.000000e+00> : vector<2x16xf32>
    %43 = tpu.matmul %42, %39, %cst_25 {dimension_numbers = #tpu.dot_dimension_numbers<[1], [0], [0], [1], [0, 0, 1, 1], [], []>} : vector<2x32xbf16>, vector<32x16xbf16>, vector<2x16xf32> -> vector<2x16xf32>
    %44 = arith.addf %41, %43 : vector<2x16xf32>
    %c24 = arith.constant 24 : index
    %c0_26 = arith.constant 0 : index
    %45 = vector.load %arg3[%c24, %c0_26] : memref<56x128xf32, #tpu.memory_space<vmem>>, vector<1x16xf32>
    %46 = vector.broadcast %45 : vector<1x16xf32> to vector<2x16xf32>
    %47 = arith.addf %44, %46 : vector<2x16xf32>
    %cst_27 = arith.constant 0.000000e+00 : f32
    %48 = vector.broadcast %cst_27 : f32 to vector<2x16xf32>
    %49 = arith.maximumf %47, %48 : vector<2x16xf32>
    %c144 = arith.constant 144 : index
    %c0_28 = arith.constant 0 : index
    %50 = vector.load %arg2[%c144, %c0_28] : memref<240x128xbf16, #tpu.memory_space<vmem>>, vector<16x1xbf16>
    %51 = arith.truncf %49 : vector<2x16xf32> to vector<2x16xbf16>
    %cst_29 = arith.constant dense<0.000000e+00> : vector<2x1xf32>
    %52 = tpu.matmul %51, %50, %cst_29 {dimension_numbers = #tpu.dot_dimension_numbers<[1], [0], [0], [1], [0, 0, 1, 1], [], []>} : vector<2x16xbf16>, vector<16x1xbf16>, vector<2x1xf32> -> vector<2x1xf32>
    %c32 = arith.constant 32 : index
    %c0_30 = arith.constant 0 : index
    %53 = vector.load %arg3[%c32, %c0_30] : memref<56x128xf32, #tpu.memory_space<vmem>>, vector<1x1xf32>
    %54 = vector.broadcast %53 : vector<1x1xf32> to vector<2x1xf32>
    %55 = arith.addf %52, %54 : vector<2x1xf32>
    %56 = vector.broadcast %55 : vector<2x1xf32> to vector<2x32xf32>
    %57 = arith.mulf %37, %56 : vector<2x32xf32>
    %cst_31 = arith.constant 1.000000e+00 : f32
    %58 = vector.broadcast %cst_31 : f32 to vector<2x1xf32>
    %59 = arith.subf %58, %55 : vector<2x1xf32>
    %60 = vector.broadcast %59 : vector<2x1xf32> to vector<2x32xf32>
    %61 = arith.mulf %14, %60 : vector<2x32xf32>
    %62 = arith.addf %57, %61 : vector<2x32xf32>
    %c160 = arith.constant 160 : index
    %c0_32 = arith.constant 0 : index
    %63 = vector.load %arg2[%c160, %c0_32] : memref<240x128xbf16, #tpu.memory_space<vmem>>, vector<32x48xbf16>
    %64 = arith.truncf %62 : vector<2x32xf32> to vector<2x32xbf16>
    %cst_33 = arith.constant dense<0.000000e+00> : vector<2x48xf32>
    %65 = tpu.matmul %64, %63, %cst_33 {dimension_numbers = #tpu.dot_dimension_numbers<[1], [0], [0], [1], [0, 0, 1, 1], [], []>} : vector<2x32xbf16>, vector<32x48xbf16>, vector<2x48xf32> -> vector<2x48xf32>
    %c40 = arith.constant 40 : index
    %c0_34 = arith.constant 0 : index
    %66 = vector.load %arg3[%c40, %c0_34] : memref<56x128xf32, #tpu.memory_space<vmem>>, vector<1x48xf32>
    %67 = vector.broadcast %66 : vector<1x48xf32> to vector<2x48xf32>
    %68 = arith.addf %65, %67 : vector<2x48xf32>
    %cst_35 = arith.constant 0.000000e+00 : f32
    %69 = vector.broadcast %cst_35 : f32 to vector<2x48xf32>
    %70 = arith.maximumf %68, %69 : vector<2x48xf32>
    %c192 = arith.constant 192 : index
    %c0_36 = arith.constant 0 : index
    %71 = vector.load %arg2[%c192, %c0_36] : memref<240x128xbf16, #tpu.memory_space<vmem>>, vector<48x3xbf16>
    %72 = arith.truncf %70 : vector<2x48xf32> to vector<2x48xbf16>
    %cst_37 = arith.constant dense<0.000000e+00> : vector<2x3xf32>
    %73 = tpu.matmul %72, %71, %cst_37 {dimension_numbers = #tpu.dot_dimension_numbers<[1], [0], [0], [1], [0, 0, 1, 1], [], []>} : vector<2x48xbf16>, vector<48x3xbf16>, vector<2x3xf32> -> vector<2x3xf32>
    %c48_38 = arith.constant 48 : index
    %c0_39 = arith.constant 0 : index
    %74 = vector.load %arg3[%c48_38, %c0_39] : memref<56x128xf32, #tpu.memory_space<vmem>>, vector<1x3xf32>
    %75 = vector.broadcast %74 : vector<1x3xf32> to vector<2x3xf32>
    %76 = arith.addf %73, %75 : vector<2x3xf32>
    %c0_40 = arith.constant 0 : index
    %c0_41 = arith.constant 0 : index
    %77 = vector.load %arg4[%c0_40, %c0_41] : memref<2x3xf32, #tpu.memory_space<vmem>>, vector<2x3xf32>
    tpu.vector_store %arg4[%c0_40, %c0_41], %76 {strides = array<i32>} : memref<2x3xf32, #tpu.memory_space<vmem>>, vector<2x3xf32>,
    return
  }
}

</mosaic_0001>

<llo_original>
// kernel: forward.1
$region0: #{forward.1}
  #allocation0 [shape = 'u32[]', space=smem, size = 0x4, offset = 0x4, fixed_abs, tag = 'smem constant byte address 0x4 - core index']
  #allocation1 [shape = 'u32[144,128]{1,0:T(1,128)}', space=vmem, size = 0x12000, scoped, tag = 'internal scratch']
  %s0 = inlined_call_operand.vmem [shape: f32[2,12], index: 0, kind: input, shape index: {}]
  %s1 = inlined_call_operand.vmem [shape: bf16[28,512], index: 1, kind: input, shape index: {}]
  %s2 = inlined_call_operand.vmem [shape: bf16[240,128], index: 2, kind: input, shape index: {}]
  %s3 = inlined_call_operand.vmem [shape: f32[56,128], index: 3, kind: input, shape index: {}]
  %s4 = inlined_call_operand.hbm [shape: f32[2,3], index: 4, kind: output, shape index: {}]
  %s5 = sld [smem:[#allocation0]]
  $region26: #{forward.1} parent=0
    _
  %s7 = ssub.s32 1, %s5
  %s8 = scalar_select 0, %s7, %s5
  $region1: #{forward.1} parent=0
    #allocation2 [shape = 'u8[1024]{0}', space=vmem, size = 0x400, scoped, tag = 'output window, operand 0, single buffered']
    #allocation3 [shape = 's32[1]{0}', space=sflag, size = 0x4, scoped, tag = 'scoped memory for forward.1']
    %9 = vsyncpa [#allocation3], 0
    // Predicated region
    $region2: #{forward.1} parent=1 // pred_check
      _
    $region3: #{forward.1} parent=1 // pred_check_branch
      %11 = sbr.rel (0) target = $region5
    $region4: #{forward.1} parent=1 // pred_region
      _
    $region5: #{forward.1} parent=1 // pred_fallthru
      _
    // Predicated region
    $region6: #{forward.1} parent=1 // pred_check
      _
    $region7: #{forward.1} parent=1 // pred_check_branch
      %13 = sbr.rel (0) target = $region9
    $region8: #{forward.1} parent=1 // pred_region
      _
    $region9: #{forward.1} parent=1 // pred_fallthru
      _
    // Predicated region
    $region10: #{forward.1} parent=1 // pred_check
      _
    $region11: #{forward.1} parent=1 // pred_check_branch
      %15 = sbr.rel (0) target = $region13
    $region12: #{forward.1} parent=1 // pred_region
      _
    $region13: #{forward.1} parent=1 // pred_fallthru
      _
    // Predicated region
    $region14: #{forward.1} parent=1 // pred_check
      _
    $region15: #{forward.1} parent=1 // pred_check_branch
      %17 = sbr.rel (0) target = $region17
    $region16: #{forward.1} parent=1 // pred_region
      _
    $region17: #{forward.1} parent=1 // pred_fallthru
      _
    %v19 = vld [vmem:[%s0] sm:$0x3]
    %v20 = vld [vmem:[%s2] sm:$0xf]
    %v21 = vld [vmem:[%s2 + $0x4] sm:$0x3]
    %v22 = vpack.c.bf16 %v19, %v19
    %v23 = vld [vmem:[%s3] sm:$0x1]
    %v24 = vlaneseq
    %v25 = vshrl.u32 %v24, 7
    %v26 = vsub.s32 0, %v25
    %v27 = vrot.slane %v23, %v26
    %v30 = vunpack.c.l.b16 %v20
    %v31 = vunpack.c.l.b16 %v21
    %v32 = vpack.c.b16 %v31, %v30
    %vm33 = vcmask 97280
    %v35 = vsel %vm33, %v22, 0
    %vm37 = vcmask 1045504
    %v39 = vsel %vm37, %v32, 0
    %41 = vmatprep.subr.bf16.mxu0 0
    %42 = vmatpush1.bf16.msra.mxu0 %v39
    %43 = vmatprep.subr.bf16.mxu0 0
    %44 = vmatpush1.bf16.msra.mxu0 0
    %45 = vmatprep.subr.bf16.mxu0 0
    %46 = vmatpush1.bf16.msra.mxu0 0
    %47 = vmatprep.subr.bf16.mxu0 0
    %48 = vmatpush1.bf16.msra.mxu0 0
    %49 = vmatprep.subr.bf16.mxu0 0
    %50 = vmatpush1.bf16.msra.mxu0 0
    %51 = vmatprep.subr.bf16.mxu0 0
    %52 = vmatpush1.bf16.msra.mxu0 0
    %53 = vmatprep.subr.bf16.mxu0 0
    %54 = vmatpush1.bf16.msra.mxu0 0
    %55 = vmatprep.subr.bf16.mxu0 0
    %56 = vmatpush1.bf16.msra.mxu0 0
    %57 = vmatprep.subr.bf16.mxu0 0
    %58 = vmatpush1.bf16.msra.mxu0 0
    %59 = vmatprep.subr.bf16.mxu0 0
    %60 = vmatpush1.bf16.msra.mxu0 0
    %61 = vmatprep.subr.bf16.mxu0 0
    %62 = vmatpush1.bf16.msra.mxu0 0
    %63 = vmatprep.subr.bf16.mxu0 0
    %64 = vmatpush1.bf16.msra.mxu0 0
    %65 = vmatprep.subr.bf16.mxu0 0
    %66 = vmatpush1.bf16.msra.mxu0 0
    %67 = vmatprep.subr.bf16.mxu0 0
    %68 = vmatpush1.bf16.msra.mxu0 0
    %69 = vmatprep.subr.bf16.mxu0 0
    %70 = vmatpush1.bf16.msra.mxu0 0
    %71 = vmatprep.subr.bf16.mxu0 0
    %72 = vmatpush1.bf16.msra.mxu0 0
    %73 = vmatprep.mubr.bf16.mxu0 0
    %74 = vmatmul.mubr.bf16.gmra.mrb[0].mxu0 %v35
    %v75 = vpop.f32.mrb[0].mxu0
    %v76 = vadd.f32 %v27, %v75
    %v77 = vpop.f32.mrb[0].mxu0
    %v78 = vpop.f32.mrb[0].mxu0
    %v79 = vpop.f32.mrb[0].mxu0
    %80 = vdwg.mxu0
    %v81 = vmax.f32 %v76, 0.0
    %v82 = vld [vmem:[%s2 + $0x8] sm:$0xf]
    %v83 = vld [vmem:[%s2 + $0xc] sm:$0xf]
    %v84 = vld [vmem:[%s2 + $0x10] sm:$0xf]
    %v85 = vld [vmem:[%s2 + $0x14] sm:$0xf]
    %v86 = vpack.c.bf16 %v81, %v81
    %v87 = vld [vmem:[%s3 + $0x8] sm:$0x1]
    %v88 = vlaneseq
    %v89 = vshrl.u32 %v88, 7
    %v90 = vsub.s32 0, %v89
    %v91 = vrot.slane %v87, %v90
    %v96 = vunpack.c.l.b16 %v82
    %v97 = vunpack.c.l.b16 %v83
    %v98 = vunpack.c.l.b16 %v84
    %v99 = vunpack.c.l.b16 %v85
    %v100 = vpack.c.b16 %v97, %v96
    %v101 = vpack.c.b16 %v99, %v98
    %vm104 = vcmask 261120
    %v106 = vsel %vm104, %v86, 0
    %108 = vmatprep.subr.bf16.mxu0 0
    %109 = vmatpush1.bf16.msra.mxu0 %v100
    %110 = vmatprep.subr.bf16.mxu0 0
    %111 = vmatpush1.bf16.msra.mxu0 %v101
    %112 = vmatprep.subr.bf16.mxu0 0
    %113 = vmatpush1.bf16.msra.mxu0 0
    %114 = vmatprep.subr.bf16.mxu0 0
    %115 = vmatpush1.bf16.msra.mxu0 0
    %116 = vmatprep.subr.bf16.mxu0 0
    %117 = vmatpush1.bf16.msra.mxu0 0
    %118 = vmatprep.subr.bf16.mxu0 0
    %119 = vmatpush1.bf16.msra.mxu0 0
    %120 = vmatprep.subr.bf16.mxu0 0
    %121 = vmatpush1.bf16.msra.mxu0 0
    %122 = vmatprep.subr.bf16.mxu0 0
    %123 = vmatpush1.bf16.msra.mxu0 0
    %124 = vmatprep.subr.bf16.mxu0 0
    %125 = vmatpush1.bf16.msra.mxu0 0
    %126 = vmatprep.subr.bf16.mxu0 0
    %127 = vmatpush1.bf16.msra.mxu0 0
    %128 = vmatprep.subr.bf16.mxu0 0
    %129 = vmatpush1.bf16.msra.mxu0 0
    %130 = vmatprep.subr.bf16.mxu0 0
    %131 = vmatpush1.bf16.msra.mxu0 0
    %132 = vmatprep.subr.bf16.mxu0 0
    %133 = vmatpush1.bf16.msra.mxu0 0
    %134 = vmatprep.subr.bf16.mxu0 0
    %135 = vmatpush1.bf16.msra.mxu0 0
    %136 = vmatprep.subr.bf16.mxu0 0
    %137 = vmatpush1.bf16.msra.mxu0 0
    %138 = vmatprep.subr.bf16.mxu0 0
    %139 = vmatpush1.bf16.msra.mxu0 0
    %140 = vmatprep.mubr.bf16.mxu0 0
    %141 = vmatmul.mubr.bf16.gmra.mrb[0].mxu0 %v106
    %v142 = vpop.f32.mrb[0].mxu0
    %v143 = vadd.f32 %v91, %v142
    %v144 = vpop.f32.mrb[0].mxu0
    %v145 = vpop.f32.mrb[0].mxu0
    %v146 = vpop.f32.mrb[0].mxu0
    %147 = vdwg.mxu0
    %v148 = vld [vmem:[%s2 + $0x18] sm:$0xf]
    %v149 = vld [vmem:[%s1] sm:$0xff]
    %v150 = vld [vmem:[%s1 + $0x8] sm:$0xff]
    %v151 = vld [vmem:[%s1 + $0x10] sm:$0xff]
    %v152 = vld [vmem:[%s1 + $0x18] sm:$0xff]
    %v153 = vld [vmem:[%s1 + $0x20] sm:$0xff]
    %v154 = vld [vmem:[%s1 + $0x28] sm:$0xff]
    %v155 = vld [vmem:[%s1 + $0x30] sm:$0x33]
    %v156 = vld [vmem:[%s1 + $0x38] sm:$0x33]
    %v165 = vunpack.c.l.b16 %v149
    %v166 = vunpack.c.h.b16 %v149
    %v167 = vunpack.c.l.b16 %v150
    %v168 = vunpack.c.h.b16 %v150
    %v169 = vunpack.c.l.b16 %v151
    %v170 = vunpack.c.h.b16 %v151
    %v171 = vunpack.c.l.b16 %v152
    %v172 = vunpack.c.h.b16 %v152
    %v173 = vunpack.c.l.b16 %v153
    %v174 = vunpack.c.h.b16 %v153
    %v175 = vunpack.c.l.b16 %v154
    %v176 = vunpack.c.h.b16 %v154
    %v177 = vunpack.c.l.b16 %v155
    %v178 = vunpack.c.h.b16 %v155
    %v179 = vunpack.c.l.b16 %v156
    %v180 = vunpack.c.h.b16 %v156
    %v181 = vpack.c.b16 %v169, %v165
    %v182 = vpack.c.b16 %v170, %v166
    %v183 = vpack.c.b16 %v171, %v167
    %v184 = vpack.c.b16 %v172, %v168
    %v185 = vpack.c.b16 %v177, %v173
    %v186 = vpack.c.b16 %v178, %v174
    %v187 = vpack.c.b16 %v179, %v175
    %v188 = vpack.c.b16 %v180, %v176
    %vm193 = vcmask 228352
    %v195 = vsel %vm193, %v148, 0
    %v198 = vsel %vm37, %v185, 0
    %v201 = vsel %vm37, %v186, 0
    %v204 = vsel %vm37, %v187, 0
    %v207 = vsel %vm37, %v188, 0
    %209 = vmatprep.subr.bf16.mxu0 %v182
    %210 = vmatpush1.bf16.msra.mxu0 %v181
    %211 = vmatprep.subr.bf16.mxu0 %v201
    %212 = vmatpush1.bf16.msra.mxu0 %v198
    %213 = vmatprep.subr.bf16.mxu0 0
    %214 = vmatpush1.bf16.msra.mxu0 0
    %215 = vmatprep.subr.bf16.mxu0 0
    %216 = vmatpush1.bf16.msra.mxu0 0
    %217 = vmatprep.subr.bf16.mxu0 0
    %218 = vmatpush1.bf16.msra.mxu0 0
    %219 = vmatprep.subr.bf16.mxu0 0
    %220 = vmatpush1.bf16.msra.mxu0 0
    %221 = vmatprep.subr.bf16.mxu0 0
    %222 = vmatpush1.bf16.msra.mxu0 0
    %223 = vmatprep.subr.bf16.mxu0 0
    %224 = vmatpush1.bf16.msra.mxu0 0
    %225 = vmatprep.subr.bf16.mxu0 0
    %226 = vmatpush1.bf16.msra.mxu0 0
    %227 = vmatprep.subr.bf16.mxu0 0
    %228 = vmatpush1.bf16.msra.mxu0 0
    %229 = vmatprep.subr.bf16.mxu0 0
    %230 = vmatpush1.bf16.msra.mxu0 0
    %231 = vmatprep.subr.bf16.mxu0 0
    %232 = vmatpush1.bf16.msra.mxu0 0
    %233 = vmatprep.subr.bf16.mxu0 0
    %234 = vmatpush1.bf16.msra.mxu0 0
    %235 = vmatprep.subr.bf16.mxu0 0
    %236 = vmatpush1.bf16.msra.mxu0 0
    %237 = vmatprep.subr.bf16.mxu0 0
    %238 = vmatpush1.bf16.msra.mxu0 0
    %239 = vmatprep.subr.bf16.mxu0 0
    %240 = vmatpush1.bf16.msra.mxu0 0
    %241 = vmatprep.mubr.bf16.mxu0 0
    %242 = vmatmul.mubr.bf16.gmra.mrb[0].mxu0 %v195
    %v243 = vpop.f32.mrb[0].mxu0
    %v244 = vadd.f32 0.0, %v243
    %v245 = vpop.f32.mrb[0].mxu0
    %v246 = vadd.f32 0.0, %v245
    %v247 = vpop.f32.mrb[0].mxu0
    %v248 = vpop.f32.mrb[0].mxu0
    %249 = vdwg.mxu0
    %250 = vmatprep.subr.bf16.mxu0 %v184
    %251 = vmatpush1.bf16.msra.mxu0 %v183
    %252 = vmatprep.subr.bf16.mxu0 %v207
    %253 = vmatpush1.bf16.msra.mxu0 %v204
    %254 = vmatprep.subr.bf16.mxu0 0
    %255 = vmatpush1.bf16.msra.mxu0 0
    %256 = vmatprep.subr.bf16.mxu0 0
    %257 = vmatpush1.bf16.msra.mxu0 0
    %258 = vmatprep.subr.bf16.mxu0 0
    %259 = vmatpush1.bf16.msra.mxu0 0
    %260 = vmatprep.subr.bf16.mxu0 0
    %261 = vmatpush1.bf16.msra.mxu0 0
    %262 = vmatprep.subr.bf16.mxu0 0
    %263 = vmatpush1.bf16.msra.mxu0 0
    %264 = vmatprep.subr.bf16.mxu0 0
    %265 = vmatpush1.bf16.msra.mxu0 0
    %266 = vmatprep.subr.bf16.mxu0 0
    %267 = vmatpush1.bf16.msra.mxu0 0
    %268 = vmatprep.subr.bf16.mxu0 0
    %269 = vmatpush1.bf16.msra.mxu0 0
    %270 = vmatprep.subr.bf16.mxu0 0
    %271 = vmatpush1.bf16.msra.mxu0 0
    %272 = vmatprep.subr.bf16.mxu0 0
    %273 = vmatpush1.bf16.msra.mxu0 0
    %274 = vmatprep.subr.bf16.mxu0 0
    %275 = vmatpush1.bf16.msra.mxu0 0
    %276 = vmatprep.subr.bf16.mxu0 0
    %277 = vmatpush1.bf16.msra.mxu0 0
    %278 = vmatprep.subr.bf16.mxu0 0
    %279 = vmatpush1.bf16.msra.mxu0 0
    %280 = vmatprep.subr.bf16.mxu0 0
    %281 = vmatpush1.bf16.msra.mxu0 0
    %282 = vmatprep.mubr.bf16.mxu0 0
    %283 = vmatmul.mubr.bf16.gmra.mrb[0].mxu0 %v195
    %v284 = vpop.f32.mrb[0].mxu0
    %v285 = vadd.f32 0.0, %v284
    %v286 = vpop.f32.mrb[0].mxu0
    %v287 = vadd.f32 0.0, %v286
    %v288 = vpop.f32.mrb[0].mxu0
    %v289 = vpop.f32.mrb[0].mxu0
    %290 = vdwg.mxu0
    %v291 = vmax.f32 %v244, 0.0
    %v292 = vmax.f32 %v246, 0.0
    %v293 = vmax.f32 %v285, 0.0
    %v294 = vmax.f32 %v287, 0.0
    %v295 = vadd.f32 %v291, %v292
    %296 = vadd.xlane.f32.xlu0 %v295
    %v297 = vpop.xlane.xlu0 %296
    %v298 = vrcp.pop 256.0
    %v299 = vmul.f32 %v297, %v298
    %v300 = vadd.f32 %v293, %v294
    %301 = vadd.xlane.f32.xlu0 %v300
    %v302 = vpop.xlane.xlu0 %301
    %v303 = vmul.f32 %v302, %v298
    %vm304 = vcmask 7168
    %v305 = vsel %vm304, %v299, %v303
    %306 = vxpose.xlu0.b32.start [1/16] %v305, 128
    %307 = vxpose.xlu0.b32.cont [2/16] 0.0, 128
    %308 = vxpose.xlu0.b32.cont [3/16] 0.0, 128
    %309 = vxpose.xlu0.b32.cont [4/16] 0.0, 128
    %310 = vxpose.xlu0.b32.cont [5/16] 0.0, 128
    %311 = vxpose.xlu0.b32.cont [6/16] 0.0, 128
    %312 = vxpose.xlu0.b32.cont [7/16] 0.0, 128
    %313 = vxpose.xlu0.b32.cont [8/16] 0.0, 128
    %314 = vxpose.xlu0.b32.cont [9/16] 0.0, 128
    %315 = vxpose.xlu0.b32.cont [10/16] 0.0, 128
    %316 = vxpose.xlu0.b32.cont [11/16] 0.0, 128
    %317 = vxpose.xlu0.b32.cont [12/16] 0.0, 128
    %318 = vxpose.xlu0.b32.cont [13/16] 0.0, 128
    %319 = vxpose.xlu0.b32.cont [14/16] 0.0, 128
    %320 = vxpose.xlu0.b32.cont [15/16] 0.0, 128
    %321 = vxpose.xlu0.b32.end [16/16] 0.0, 128
    %v322 = vpop.trf.xlu0
    %v323 = vpop.trf.xlu0
    %v324 = vpop.trf.xlu0
    %v325 = vpop.trf.xlu0
    %v326 = vpop.trf.xlu0
    %v327 = vpop.trf.xlu0
    %v328 = vpop.trf.xlu0
    %v329 = vpop.trf.xlu0
    %v330 = vpop.trf.xlu0
    %v331 = vpop.trf.xlu0
    %v332 = vpop.trf.xlu0
    %v333 = vpop.trf.xlu0
    %v334 = vpop.trf.xlu0
    %v335 = vpop.trf.xlu0
    %v336 = vpop.trf.xlu0
    %v337 = vpop.trf.xlu0
    %v338 = vld [vmem:[%s2 + $0x20] sm:$0xf]
    %v339 = vpack.c.bf16 %v322, %v322
    %v340 = vld [vmem:[%s3 + $0x10] sm:$0x1]
    %v341 = vlaneseq
    %v342 = vshrl.u32 %v341, 7
    %v343 = vsub.s32 0, %v342
    %v344 = vrot.slane %v340, %v343
    %vm345 = vcmask 64512
    %v347 = vsel %vm345, %v339, 0
    %vm349 = vcmask 1043456
    %v351 = vsel %vm349, %v338, 0
    %353 = vmatprep.subr.bf16.mxu0 0
    %354 = vmatpush1.bf16.msra.mxu0 %v351
    %355 = vmatprep.subr.bf16.mxu0 0
    %356 = vmatpush1.bf16.msra.mxu0 0
    %357 = vmatprep.subr.bf16.mxu0 0
    %358 = vmatpush1.bf16.msra.mxu0 0
    %359 = vmatprep.subr.bf16.mxu0 0
    %360 = vmatpush1.bf16.msra.mxu0 0
    %361 = vmatprep.subr.bf16.mxu0 0
    %362 = vmatpush1.bf16.msra.mxu0 0
    %363 = vmatprep.subr.bf16.mxu0 0
    %364 = vmatpush1.bf16.msra.mxu0 0
    %365 = vmatprep.subr.bf16.mxu0 0
    %366 = vmatpush1.bf16.msra.mxu0 0
    %367 = vmatprep.subr.bf16.mxu0 0
    %368 = vmatpush1.bf16.msra.mxu0 0
    %369 = vmatprep.subr.bf16.mxu0 0
    %370 = vmatpush1.bf16.msra.mxu0 0
    %371 = vmatprep.subr.bf16.mxu0 0
    %372 = vmatpush1.bf16.msra.mxu0 0
    %373 = vmatprep.subr.bf16.mxu0 0
    %374 = vmatpush1.bf16.msra.mxu0 0
    %375 = vmatprep.subr.bf16.mxu0 0
    %376 = vmatpush1.bf16.msra.mxu0 0
    %377 = vmatprep.subr.bf16.mxu0 0
    %378 = vmatpush1.bf16.msra.mxu0 0
    %379 = vmatprep.subr.bf16.mxu0 0
    %380 = vmatpush1.bf16.msra.mxu0 0
    %381 = vmatprep.subr.bf16.mxu0 0
    %382 = vmatpush1.bf16.msra.mxu0 0
    %383 = vmatprep.subr.bf16.mxu0 0
    %384 = vmatpush1.bf16.msra.mxu0 0
    %385 = vmatprep.mubr.bf16.mxu0 0
    %386 = vmatmul.mubr.bf16.gmra.mrb[0].mxu0 %v347
    %v387 = vpop.f32.mrb[0].mxu0
    %v388 = vadd.f32 %v344, %v387
    %v389 = vpop.f32.mrb[0].mxu0
    %v390 = vpop.f32.mrb[0].mxu0
    %v391 = vpop.f32.mrb[0].mxu0
    %392 = vdwg.mxu0
    %v393 = vld [vmem:[%s2 + $0x28] sm:$0xf]
    %v394 = vld [vmem:[%s2 + $0x2c] sm:$0xf]
    %v395 = vld [vmem:[%s2 + $0x30] sm:$0xf]
    %v396 = vld [vmem:[%s2 + $0x34] sm:$0xf]
    %v397 = vld [vmem:[%s2 + $0x38] sm:$0xf]
    %v398 = vld [vmem:[%s2 + $0x3c] sm:$0xf]
    %v399 = vld [vmem:[%s2 + $0x40] sm:$0xf]
    %v400 = vld [vmem:[%s2 + $0x44] sm:$0xf]
    %v401 = vpack.c.bf16 %v388, %v388
    %v402 = vpack.c.bf16 %v143, %v143
    %v407 = vunpack.c.l.b16 %v397
    %v408 = vunpack.c.l.b16 %v398
    %v409 = vunpack.c.l.b16 %v399
    %v410 = vunpack.c.l.b16 %v400
    %v411 = vpack.c.b16 %v408, %v407
    %v412 = vpack.c.b16 %v410, %v409
    %v416 = vsel %vm104, %v402, 0
    %418 = vmatprep.subr.bf16.mxu0 0
    %419 = vmatpush1.bf16.msra.mxu0 %v411
    %420 = vmatprep.subr.bf16.mxu0 0
    %421 = vmatpush1.bf16.msra.mxu0 %v412
    %422 = vmatprep.subr.bf16.mxu0 0
    %423 = vmatpush1.bf16.msra.mxu0 0
    %424 = vmatprep.subr.bf16.mxu0 0
    %425 = vmatpush1.bf16.msra.mxu0 0
    %426 = vmatprep.subr.bf16.mxu0 0
    %427 = vmatpush1.bf16.msra.mxu0 0
    %428 = vmatprep.subr.bf16.mxu0 0
    %429 = vmatpush1.bf16.msra.mxu0 0
    %430 = vmatprep.subr.bf16.mxu0 0
    %431 = vmatpush1.bf16.msra.mxu0 0
    %432 = vmatprep.subr.bf16.mxu0 0
    %433 = vmatpush1.bf16.msra.mxu0 0
    %434 = vmatprep.subr.bf16.mxu0 0
    %435 = vmatpush1.bf16.msra.mxu0 0
    %436 = vmatprep.subr.bf16.mxu0 0
    %437 = vmatpush1.bf16.msra.mxu0 0
    %438 = vmatprep.subr.bf16.mxu0 0
    %439 = vmatpush1.bf16.msra.mxu0 0
    %440 = vmatprep.subr.bf16.mxu0 0
    %441 = vmatpush1.bf16.msra.mxu0 0
    %442 = vmatprep.subr.bf16.mxu0 0
    %443 = vmatpush1.bf16.msra.mxu0 0
    %444 = vmatprep.subr.bf16.mxu0 0
    %445 = vmatpush1.bf16.msra.mxu0 0
    %446 = vmatprep.subr.bf16.mxu0 0
    %447 = vmatpush1.bf16.msra.mxu0 0
    %448 = vmatprep.subr.bf16.mxu0 0
    %449 = vmatpush1.bf16.msra.mxu0 0
    %450 = vmatprep.mubr.bf16.mxu0 0
    %451 = vmatmul.mubr.bf16.gmra.mrb[0].mxu0 %v416
    %v452 = vpop.f32.mrb[0].mxu0
    %v453 = vadd.f32 0.0, %v452
    %v454 = vpop.f32.mrb[0].mxu0
    %v455 = vpop.f32.mrb[0].mxu0
    %v456 = vpop.f32.mrb[0].mxu0
    %457 = vdwg.mxu0
    %v462 = vunpack.c.l.b16 %v393
    %v463 = vunpack.c.l.b16 %v394
    %v464 = vunpack.c.l.b16 %v395
    %v465 = vunpack.c.l.b16 %v396
    %v466 = vpack.c.b16 %v463, %v462
    %v467 = vpack.c.b16 %v465, %v464
    %v471 = vsel %vm104, %v401, 0
    %473 = vmatprep.subr.bf16.mxu0 0
    %474 = vmatpush1.bf16.msra.mxu0 %v466
    %475 = vmatprep.subr.bf16.mxu0 0
    %476 = vmatpush1.bf16.msra.mxu0 %v467
    %477 = vmatprep.subr.bf16.mxu0 0
    %478 = vmatpush1.bf16.msra.mxu0 0
    %479 = vmatprep.subr.bf16.mxu0 0
    %480 = vmatpush1.bf16.msra.mxu0 0
    %481 = vmatprep.subr.bf16.mxu0 0
    %482 = vmatpush1.bf16.msra.mxu0 0
    %483 = vmatprep.subr.bf16.mxu0 0
    %484 = vmatpush1.bf16.msra.mxu0 0
    %485 = vmatprep.subr.bf16.mxu0 0
    %486 = vmatpush1.bf16.msra.mxu0 0
    %487 = vmatprep.subr.bf16.mxu0 0
    %488 = vmatpush1.bf16.msra.mxu0 0
    %489 = vmatprep.subr.bf16.mxu0 0
    %490 = vmatpush1.bf16.msra.mxu0 0
    %491 = vmatprep.subr.bf16.mxu0 0
    %492 = vmatpush1.bf16.msra.mxu0 0
    %493 = vmatprep.subr.bf16.mxu0 0
    %494 = vmatpush1.bf16.msra.mxu0 0
    %495 = vmatprep.subr.bf16.mxu0 0
    %496 = vmatpush1.bf16.msra.mxu0 0
    %497 = vmatprep.subr.bf16.mxu0 0
    %498 = vmatpush1.bf16.msra.mxu0 0
    %499 = vmatprep.subr.bf16.mxu0 0
    %500 = vmatpush1.bf16.msra.mxu0 0
    %501 = vmatprep.subr.bf16.mxu0 0
    %502 = vmatpush1.bf16.msra.mxu0 0
    %503 = vmatprep.subr.bf16.mxu0 0
    %504 = vmatpush1.bf16.msra.mxu0 0
    %505 = vmatprep.mubr.bf16.mxu0 0
    %506 = vmatmul.mubr.bf16.gmra.mrb[0].mxu0 %v471
    %v507 = vpop.f32.mrb[0].mxu0
    %v508 = vadd.f32 %v453, %v507
    %v509 = vpop.f32.mrb[0].mxu0
    %v510 = vpop.f32.mrb[0].mxu0
    %v511 = vpop.f32.mrb[0].mxu0
    %512 = vdwg.mxu0
    %v513 = vld [vmem:[%s3 + $0x18] sm:$0x1]
    %v514 = vlaneseq
    %v515 = vshrl.u32 %v514, 7
    %v516 = vsub.s32 0, %v515
    %v517 = vrot.slane %v513, %v516
    %v518 = vadd.f32 %v508, %v517
    %v519 = vmax.f32 %v518, 0.0
    %v520 = vld [vmem:[%s2 + $0x48] sm:$0xf]
    %v521 = vld [vmem:[%s2 + $0x4c] sm:$0xf]
    %v522 = vpack.c.bf16 %v519, %v519
    %v523 = vld [vmem:[%s3 + $0x20] sm:$0x1]
    %v524 = vlaneseq
    %v525 = vshrl.u32 %v524, 7
    %v526 = vsub.s32 0, %v525
    %v527 = vrot.slane %v523, %v526
    %v530 = vunpack.c.l.b16 %v520
    %v531 = vunpack.c.l.b16 %v521
    %v532 = vpack.c.b16 %v531, %v530
    %vm534 = vcmask 130048
    %v536 = vsel %vm534, %v522, 0
    %538 = vmatprep.subr.bf16.mxu0 0
    %539 = vmatpush1.bf16.msra.mxu0 %v532
    %540 = vmatprep.subr.bf16.mxu0 0
    %541 = vmatpush1.bf16.msra.mxu0 0
    %542 = vmatprep.subr.bf16.mxu0 0
    %543 = vmatpush1.bf16.msra.mxu0 0
    %544 = vmatprep.subr.bf16.mxu0 0
    %545 = vmatpush1.bf16.msra.mxu0 0
    %546 = vmatprep.subr.bf16.mxu0 0
    %547 = vmatpush1.bf16.msra.mxu0 0
    %548 = vmatprep.subr.bf16.mxu0 0
    %549 = vmatpush1.bf16.msra.mxu0 0
    %550 = vmatprep.subr.bf16.mxu0 0
    %551 = vmatpush1.bf16.msra.mxu0 0
    %552 = vmatprep.subr.bf16.mxu0 0
    %553 = vmatpush1.bf16.msra.mxu0 0
    %554 = vmatprep.subr.bf16.mxu0 0
    %555 = vmatpush1.bf16.msra.mxu0 0
    %556 = vmatprep.subr.bf16.mxu0 0
    %557 = vmatpush1.bf16.msra.mxu0 0
    %558 = vmatprep.subr.bf16.mxu0 0
    %559 = vmatpush1.bf16.msra.mxu0 0
    %560 = vmatprep.subr.bf16.mxu0 0
    %561 = vmatpush1.bf16.msra.mxu0 0
    %562 = vmatprep.subr.bf16.mxu0 0
    %563 = vmatpush1.bf16.msra.mxu0 0
    %564 = vmatprep.subr.bf16.mxu0 0
    %565 = vmatpush1.bf16.msra.mxu0 0
    %566 = vmatprep.subr.bf16.mxu0 0
    %567 = vmatpush1.bf16.msra.mxu0 0
    %568 = vmatprep.subr.bf16.mxu0 0
    %569 = vmatpush1.bf16.msra.mxu0 0
    %570 = vmatprep.mubr.bf16.mxu0 0
    %571 = vmatmul.mubr.bf16.gmra.mrb[0].mxu0 %v536
    %v572 = vpop.f32.mrb[0].mxu0
    %v573 = vadd.f32 %v527, %v572
    %v574 = vpop.f32.mrb[0].mxu0
    %v575 = vpop.f32.mrb[0].mxu0
    %v576 = vpop.f32.mrb[0].mxu0
    %577 = vdwg.mxu0
    %579 = vset.pattern.permute.xlu0 0
    %580 = vperm.xlu0 %579, %v573
    %v581 = vpop.permute.xlu0 %580
    %v583 = vmul.f32 %v388, %v581
    %v584 = vsub.f32 1.0, %v573
    %586 = vset.pattern.permute.xlu0 0
    %587 = vperm.xlu0 %586, %v584
    %v588 = vpop.permute.xlu0 %587
    %v590 = vmul.f32 %v143, %v588
    %v591 = vadd.f32 %v583, %v590
    %v592 = vld [vmem:[%s2 + $0x50] sm:$0xf]
    %v593 = vld [vmem:[%s2 + $0x54] sm:$0xf]
    %v594 = vld [vmem:[%s2 + $0x58] sm:$0xf]
    %v595 = vld [vmem:[%s2 + $0x5c] sm:$0xf]
    %v596 = vpack.c.bf16 %v591, %v591
    %v597 = vld [vmem:[%s3 + $0x28] sm:$0x1]
    %v598 = vlaneseq
    %v599 = vshrl.u32 %v598, 7
    %v600 = vsub.s32 0, %v599
    %v601 = vrot.slane %v597, %v600
    %v606 = vunpack.c.l.b16 %v592
    %v607 = vunpack.c.l.b16 %v593
    %v608 = vunpack.c.l.b16 %v594
    %v609 = vunpack.c.l.b16 %v595
    %v610 = vpack.c.b16 %v607, %v606
    %v611 = vpack.c.b16 %v609, %v608
    %v615 = vsel %vm104, %v596, 0
    %617 = vmatprep.subr.bf16.mxu0 0
    %618 = vmatpush1.bf16.msra.mxu0 %v610
    %619 = vmatprep.subr.bf16.mxu0 0
    %620 = vmatpush1.bf16.msra.mxu0 %v611
    %621 = vmatprep.subr.bf16.mxu0 0
    %622 = vmatpush1.bf16.msra.mxu0 0
    %623 = vmatprep.subr.bf16.mxu0 0
    %624 = vmatpush1.bf16.msra.mxu0 0
    %625 = vmatprep.subr.bf16.mxu0 0
    %626 = vmatpush1.bf16.msra.mxu0 0
    %627 = vmatprep.subr.bf16.mxu0 0
    %628 = vmatpush1.bf16.msra.mxu0 0
    %629 = vmatprep.subr.bf16.mxu0 0
    %630 = vmatpush1.bf16.msra.mxu0 0
    %631 = vmatprep.subr.bf16.mxu0 0
    %632 = vmatpush1.bf16.msra.mxu0 0
    %633 = vmatprep.subr.bf16.mxu0 0
    %634 = vmatpush1.bf16.msra.mxu0 0
    %635 = vmatprep.subr.bf16.mxu0 0
    %636 = vmatpush1.bf16.msra.mxu0 0
    %637 = vmatprep.subr.bf16.mxu0 0
    %638 = vmatpush1.bf16.msra.mxu0 0
    %639 = vmatprep.subr.bf16.mxu0 0
    %640 = vmatpush1.bf16.msra.mxu0 0
    %641 = vmatprep.subr.bf16.mxu0 0
    %642 = vmatpush1.bf16.msra.mxu0 0
    %643 = vmatprep.subr.bf16.mxu0 0
    %644 = vmatpush1.bf16.msra.mxu0 0
    %645 = vmatprep.subr.bf16.mxu0 0
    %646 = vmatpush1.bf16.msra.mxu0 0
    %647 = vmatprep.subr.bf16.mxu0 0
    %648 = vmatpush1.bf16.msra.mxu0 0
    %649 = vmatprep.mubr.bf16.mxu0 0
    %650 = vmatmul.mubr.bf16.gmra.mrb[0].mxu0 %v615
    %v651 = vpop.f32.mrb[0].mxu0
    %v652 = vadd.f32 %v601, %v651
    %v653 = vpop.f32.mrb[0].mxu0
    %v654 = vpop.f32.mrb[0].mxu0
    %v655 = vpop.f32.mrb[0].mxu0
    %656 = vdwg.mxu0
    %v657 = vmax.f32 %v652, 0.0
    %v658 = vld [vmem:[%s2 + $0x60] sm:$0xf]
    %v659 = vld [vmem:[%s2 + $0x64] sm:$0xf]
    %v660 = vld [vmem:[%s2 + $0x68] sm:$0xf]
    %v661 = vld [vmem:[%s2 + $0x6c] sm:$0xf]
    %v662 = vld [vmem:[%s2 + $0x70] sm:$0xf]
    %v663 = vld [vmem:[%s2 + $0x74] sm:$0xf]
    %v664 = vpack.c.bf16 %v657, %v657
    %v665 = vld [vmem:[%s3 + $0x30] sm:$0x1]
    %v666 = vlaneseq
    %v667 = vshrl.u32 %v666, 7
    %v668 = vsub.s32 0, %v667
    %v669 = vrot.slane %v665, %v668
    %v676 = vunpack.c.l.b16 %v658
    %v677 = vunpack.c.l.b16 %v659
    %v678 = vunpack.c.l.b16 %v660
    %v679 = vunpack.c.l.b16 %v661
    %v680 = vunpack.c.l.b16 %v662
    %v681 = vunpack.c.l.b16 %v663
    %v682 = vpack.c.b16 %v677, %v676
    %v683 = vpack.c.b16 %v679, %v678
    %v684 = vpack.c.b16 %v681, %v680
    %vm688 = vcmask 392192
    %v690 = vsel %vm688, %v664, 0
    %692 = vmatprep.subr.bf16.mxu0 0
    %693 = vmatpush1.bf16.msra.mxu0 %v682
    %694 = vmatprep.subr.bf16.mxu0 0
    %695 = vmatpush1.bf16.msra.mxu0 %v683
    %696 = vmatprep.subr.bf16.mxu0 0
    %697 = vmatpush1.bf16.msra.mxu0 %v684
    %698 = vmatprep.subr.bf16.mxu0 0
    %699 = vmatpush1.bf16.msra.mxu0 0
    %700 = vmatprep.subr.bf16.mxu0 0
    %701 = vmatpush1.bf16.msra.mxu0 0
    %702 = vmatprep.subr.bf16.mxu0 0
    %703 = vmatpush1.bf16.msra.mxu0 0
    %704 = vmatprep.subr.bf16.mxu0 0
    %705 = vmatpush1.bf16.msra.mxu0 0
    %706 = vmatprep.subr.bf16.mxu0 0
    %707 = vmatpush1.bf16.msra.mxu0 0
    %708 = vmatprep.subr.bf16.mxu0 0
    %709 = vmatpush1.bf16.msra.mxu0 0
    %710 = vmatprep.subr.bf16.mxu0 0
    %711 = vmatpush1.bf16.msra.mxu0 0
    %712 = vmatprep.subr.bf16.mxu0 0
    %713 = vmatpush1.bf16.msra.mxu0 0
    %714 = vmatprep.subr.bf16.mxu0 0
    %715 = vmatpush1.bf16.msra.mxu0 0
    %716 = vmatprep.subr.bf16.mxu0 0
    %717 = vmatpush1.bf16.msra.mxu0 0
    %718 = vmatprep.subr.bf16.mxu0 0
    %719 = vmatpush1.bf16.msra.mxu0 0
    %720 = vmatprep.subr.bf16.mxu0 0
    %721 = vmatpush1.bf16.msra.mxu0 0
    %722 = vmatprep.subr.bf16.mxu0 0
    %723 = vmatpush1.bf16.msra.mxu0 0
    %724 = vmatprep.mubr.bf16.mxu0 0
    %725 = vmatmul.mubr.bf16.gmra.mrb[0].mxu0 %v690
    %v726 = vpop.f32.mrb[0].mxu0
    %v727 = vadd.f32 %v669, %v726
    %v728 = vpop.f32.mrb[0].mxu0
    %v729 = vpop.f32.mrb[0].mxu0
    %v730 = vpop.f32.mrb[0].mxu0
    %731 = vdwg.mxu0
    %vm732 = vcmask 17408
    %733 = vst.msk [vmem:[#allocation2] sm:$0x3] %vm732, %v727
    // Predicated region
    $region18: #{forward.1} parent=1 // pred_check
      _
    $region19: #{forward.1} parent=1 // pred_check_branch
      %735 = sbr.rel (0) target = $region21
    $region20: #{forward.1} parent=1 // pred_region
      %s737 = ssub.s32 32, 32
      %738 = vsyncadd [#allocation3], %s737
      %s740 = sshll.u32 [#allocation2], 4
      %s741 = int_to_ptr.vmem [resolvable:$true] %s740
      %743 = dma.vmem_to_hbm [thread:$0]  %s741, 32, %s4, [#allocation3]
    $region21: #{forward.1} parent=1 // pred_fallthru
      _
    // Predicated region
    $region22: #{forward.1} parent=1 // pred_check
      _
    $region23: #{forward.1} parent=1 // pred_check_branch
      %745 = sbr.rel (0) target = $region25
    $region24: #{forward.1} parent=1 // pred_region
      %746 = dma.done [#allocation3], 32
    $region25: #{forward.1} parent=1 // pred_fallthru
      _
    %747 = vsyncpa [#allocation3], 1

</llo_original>
